<compile_context>
chip_gen: v5e
topology: v5e:2x2
jax: 0.10.0
libtpu: 0.0.40
codegen_flags: <defaults>
</compile_context>

<pallas_src>
import jax
import jax.numpy as jnp
from jax.experimental import pallas as pl
from jax.experimental.pallas import tpu as pltpu


def _make_xcorr_kernel(bt, hz, wz, hx, wx):
    t_taps = hz * wz
    p = hx * wx

    def kernel(z_ref, x_ref, o_ref):
        # z_ref: (bt, T, C)   template taps on sublanes, channels on lanes
        # x_ref: (bt, C, P)   search features, flattened spatial on lanes
        # o_ref: (bt, P)      response accumulated at every x position; the
        #                     positions with i < Ho, j < Wo hold the valid xcorr.
        z = z_ref[...]
        x = x_ref[...]
        outs = []
        for b in range(bt):  # static unroll; bt is small
            # MXU contraction over channels: m[t, q] = sum_c z[b,t,c] * x[b,c,q]
            m = jnp.dot(z[b], x[b], preferred_element_type=jnp.float32)  # (T, P)
            acc = m[0:1, :]  # tap (u=0, v=0): zero spatial shift
            for tap in range(1, t_taps):
                off = (tap // wz) * wx + (tap % wz)
                # acc[q] += m[tap, q + off]  ==  left-rotate lanes by `off`.
                # Wrapped entries only land on invalid output positions, which
                # are sliced away wrapper-side.
                acc = acc + pltpu.roll(m[tap:tap + 1, :], shift=p - off, axis=1)
            outs.append(acc)
        o_ref[...] = jnp.concatenate(outs, axis=0)

    return kernel


def _pick_batch_block(batch):
    # Output block is (Bt, P): Bt must equal B or be a multiple of 8 (sublane
    # rule).  Prefer >=2 grid steps when the batch is big enough (v7x has two
    # TensorCores); otherwise take the whole batch in a single grid step so the
    # per-step pipeline overhead is paid once.
    if batch >= 16 and batch % 8 == 0:
        return 8
    return batch


def siamese_xcorr(z_f, x_f):
    """SiamFC batched cross-correlation via a Pallas TPU kernel.

    z_f: (B, C, Hz, Wz), x_f: (B, C, Hx, Wx) -> (B, 1, Hx-Hz+1, Wx-Wz+1) f32.
    """
    b, c, hz, wz = z_f.shape
    bx, cx, hx, wx = x_f.shape
    assert b == bx and c == cx, "batch/channel mismatch between z_f and x_f"
    assert hz <= hx and wz <= wx, "template must not exceed search region"
    ho, wo = hx - hz + 1, wx - wz + 1
    t_taps, p = hz * wz, hx * wx

    bt = _pick_batch_block(b)
    grid = (b // bt,)

    # Lane-dense layouts (cheap XLA reshapes, no data duplication):
    #   z: (B, T, C) -- taps on sublanes, channels on lanes.
    #   x: (B, C, P) -- flattened search spatial on lanes.
    z2 = z_f.reshape(b, c, t_taps).transpose(0, 2, 1)
    x2 = x_f.reshape(b, c, p)

    # Raise the VMEM ceiling only when blocks actually grow (matters on v7x:
    # 64 MiB physical / 32 MiB scoped default).  Demo sizes stay far below.
    in_bytes = jnp.dtype(x_f.dtype).itemsize
    block_bytes = (2 * bt * t_taps * c * jnp.dtype(z_f.dtype).itemsize  # z (dbl-buf)
                   + 2 * bt * c * p * in_bytes                          # x (dbl-buf)
                   + 2 * bt * p * 4                                     # out (dbl-buf)
                   + bt * t_taps * p * 4)                               # matmul result
    compiler_kwargs = dict(dimension_semantics=("parallel",))
    if block_bytes > 24 * 1024 * 1024:
        compiler_kwargs["vmem_limit_bytes"] = int(min(2 * block_bytes, 64 * 1024 * 1024))

    out_flat = pl.pallas_call(
        _make_xcorr_kernel(bt, hz, wz, hx, wx),
        out_shape=jax.ShapeDtypeStruct((b, p), jnp.float32),
        grid_spec=pltpu.PrefetchScalarGridSpec(
            num_scalar_prefetch=0,
            grid=grid,
            in_specs=[
                pl.BlockSpec((bt, t_taps, c), lambda g: (g, 0, 0)),
                pl.BlockSpec((bt, c, p), lambda g: (g, 0, 0)),
            ],
            out_specs=pl.BlockSpec((bt, p), lambda g: (g, 0)),
        ),
        compiler_params=pltpu.CompilerParams(**compiler_kwargs),
    )(z2, x2)

    # Carve the valid (Ho, Wo) window back out and restore NCHW.
    resp = out_flat.reshape(b, hx, wx)[:, :ho, :wo]
    return resp[:, None, :, :]


def _reference_xcorr(z_f, x_f):
    # Pure-JAX reference: per-batch valid cross-correlation (NCHW).
    b, c, hz, wz = z_f.shape
    _, _, hx, wx = x_f.shape
    ho, wo = hx - hz + 1, wx - wz + 1
    zf = z_f.astype(jnp.float32)
    xf = x_f.astype(jnp.float32)
    out = jnp.zeros((b, 1, ho, wo), jnp.float32)
    for u in range(hz):
        for v in range(wz):
            patch = xf[:, :, u:u + ho, v:v + wo]           # (B, C, Ho, Wo)
            w = zf[:, :, u, v][:, :, None, None]           # (B, C, 1, 1)
            out = out + jnp.sum(patch * w, axis=1, keepdims=True)
    return out


if __name__ == "__main__":
    key = jax.random.PRNGKey(0)
    kz, kx = jax.random.split(key)

    B, C = 2, 4
    Hz = Wz = 4      # exemplar spatial size
    Hx = Wx = 16     # search-region spatial size

    z_f = jax.random.normal(kz, (B, C, Hz, Wz), dtype=jnp.float32)
    x_f = jax.random.normal(kx, (B, C, Hx, Wx), dtype=jnp.float32)
    # Snap values to bf16-representable f32 so the correctness check is
    # insensitive to the MXU's internal f32-matmul pass count.
    z_f = z_f.astype(jnp.bfloat16).astype(jnp.float32)
    x_f = x_f.astype(jnp.bfloat16).astype(jnp.float32)

    out = jax.jit(siamese_xcorr)(z_f, x_f)
    out = jax.block_until_ready(out)

    ref = _reference_xcorr(z_f, x_f)
    assert out.shape == (B, 1, Hx - Hz + 1, Wx - Wz + 1), out.shape
    assert jnp.allclose(out, ref, atol=1e-3, rtol=1e-3), float(
        jnp.max(jnp.abs(out - ref)))

    print("KERNEL_OK")
</pallas_src>

<mosaic_0001>
module attributes {stable_mosaic.version = 11 : i64} {
  func.func @kernel(%arg0: i32, %arg1: memref<2x16x4xf32, #tpu.memory_space<vmem>>, %arg2: memref<2x4x256xf32, #tpu.memory_space<vmem>>, %arg3: memref<2x256xf32, #tpu.memory_space<vmem>>) attributes {dimension_semantics = [#tpu.dimension_semantics<parallel>], iteration_bounds = array<i64: 1>, scalar_prefetch = 0 : i64, scratch_operands = 0 : i64, tpu.core_type = #tpu.core_type<tc>, window_params = [{transform_indices = @transform_0, window_bounds = array<i64: 2, 16, 4>}, {transform_indices = @transform_1, window_bounds = array<i64: 2, 4, 256>}, {transform_indices = @transform_2, window_bounds = array<i64: 2, 256>}]} {
    %c0 = arith.constant 0 : index
    %c0_0 = arith.constant 0 : index
    %c0_1 = arith.constant 0 : index
    %0 = vector.load %arg1[%c0, %c0_0, %c0_1] : memref<2x16x4xf32, #tpu.memory_space<vmem>>, vector<2x16x4xf32>
    %c0_2 = arith.constant 0 : index
    %c0_3 = arith.constant 0 : index
    %c0_4 = arith.constant 0 : index
    %1 = vector.load %arg2[%c0_2, %c0_3, %c0_4] : memref<2x4x256xf32, #tpu.memory_space<vmem>>, vector<2x4x256xf32>
    %2 = vector.extract_strided_slice %0 {offsets = [0, 0, 0], sizes = [1, 16, 4], strides = [1, 1, 1]} : vector<2x16x4xf32> to vector<1x16x4xf32>
    %3 = vector.shape_cast %2 : vector<1x16x4xf32> to vector<16x4xf32>
    %4 = vector.extract_strided_slice %1 {offsets = [0, 0, 0], sizes = [1, 4, 256], strides = [1, 1, 1]} : vector<2x4x256xf32> to vector<1x4x256xf32>
    %5 = vector.shape_cast %4 : vector<1x4x256xf32> to vector<4x256xf32>
    %cst = arith.constant dense<0.000000e+00> : vector<16x256xf32>
    %6 = tpu.matmul %3, %5, %cst {dimension_numbers = #tpu.dot_dimension_numbers<[1], [0], [0], [1], [0, 0, 1, 1], [], []>} : vector<16x4xf32>, vector<4x256xf32>, vector<16x256xf32> -> vector<16x256xf32>
    %7 = vector.extract_strided_slice %6 {offsets = [0, 0], sizes = [1, 256], strides = [1, 1]} : vector<16x256xf32> to vector<1x256xf32>
    %8 = vector.extract_strided_slice %6 {offsets = [1, 0], sizes = [1, 256], strides = [1, 1]} : vector<16x256xf32> to vector<1x256xf32>
    %c255_i32 = arith.constant 255 : i32
    %9 = tpu.dynamic_rotate %8 by %c255_i32 dim 1 : vector<1x256xf32>, i32 -> vector<1x256xf32>
    %10 = arith.addf %7, %9 : vector<1x256xf32>
    %11 = vector.extract_strided_slice %6 {offsets = [2, 0], sizes = [1, 256], strides = [1, 1]} : vector<16x256xf32> to vector<1x256xf32>
    %c254_i32 = arith.constant 254 : i32
    %12 = tpu.dynamic_rotate %11 by %c254_i32 dim 1 : vector<1x256xf32>, i32 -> vector<1x256xf32>
    %13 = arith.addf %10, %12 : vector<1x256xf32>
    %14 = vector.extract_strided_slice %6 {offsets = [3, 0], sizes = [1, 256], strides = [1, 1]} : vector<16x256xf32> to vector<1x256xf32>
    %c253_i32 = arith.constant 253 : i32
    %15 = tpu.dynamic_rotate %14 by %c253_i32 dim 1 : vector<1x256xf32>, i32 -> vector<1x256xf32>
    %16 = arith.addf %13, %15 : vector<1x256xf32>
    %17 = vector.extract_strided_slice %6 {offsets = [4, 0], sizes = [1, 256], strides = [1, 1]} : vector<16x256xf32> to vector<1x256xf32>
    %c240_i32 = arith.constant 240 : i32
    %18 = tpu.dynamic_rotate %17 by %c240_i32 dim 1 : vector<1x256xf32>, i32 -> vector<1x256xf32>
    %19 = arith.addf %16, %18 : vector<1x256xf32>
    %20 = vector.extract_strided_slice %6 {offsets = [5, 0], sizes = [1, 256], strides = [1, 1]} : vector<16x256xf32> to vector<1x256xf32>
    %c239_i32 = arith.constant 239 : i32
    %21 = tpu.dynamic_rotate %20 by %c239_i32 dim 1 : vector<1x256xf32>, i32 -> vector<1x256xf32>
    %22 = arith.addf %19, %21 : vector<1x256xf32>
    %23 = vector.extract_strided_slice %6 {offsets = [6, 0], sizes = [1, 256], strides = [1, 1]} : vector<16x256xf32> to vector<1x256xf32>
    %c238_i32 = arith.constant 238 : i32
    %24 = tpu.dynamic_rotate %23 by %c238_i32 dim 1 : vector<1x256xf32>, i32 -> vector<1x256xf32>
    %25 = arith.addf %22, %24 : vector<1x256xf32>
    %26 = vector.extract_strided_slice %6 {offsets = [7, 0], sizes = [1, 256], strides = [1, 1]} : vector<16x256xf32> to vector<1x256xf32>
    %c237_i32 = arith.constant 237 : i32
    %27 = tpu.dynamic_rotate %26 by %c237_i32 dim 1 : vector<1x256xf32>, i32 -> vector<1x256xf32>
    %28 = arith.addf %25, %27 : vector<1x256xf32>
    %29 = vector.extract_strided_slice %6 {offsets = [8, 0], sizes = [1, 256], strides = [1, 1]} : vector<16x256xf32> to vector<1x256xf32>
    %c224_i32 = arith.constant 224 : i32
    %30 = tpu.dynamic_rotate %29 by %c224_i32 dim 1 : vector<1x256xf32>, i32 -> vector<1x256xf32>
    %31 = arith.addf %28, %30 : vector<1x256xf32>
    %32 = vector.extract_strided_slice %6 {offsets = [9, 0], sizes = [1, 256], strides = [1, 1]} : vector<16x256xf32> to vector<1x256xf32>
    %c223_i32 = arith.constant 223 : i32
    %33 = tpu.dynamic_rotate %32 by %c223_i32 dim 1 : vector<1x256xf32>, i32 -> vector<1x256xf32>
    %34 = arith.addf %31, %33 : vector<1x256xf32>
    %35 = vector.extract_strided_slice %6 {offsets = [10, 0], sizes = [1, 256], strides = [1, 1]} : vector<16x256xf32> to vector<1x256xf32>
    %c222_i32 = arith.constant 222 : i32
    %36 = tpu.dynamic_rotate %35 by %c222_i32 dim 1 : vector<1x256xf32>, i32 -> vector<1x256xf32>
    %37 = arith.addf %34, %36 : vector<1x256xf32>
    %38 = vector.extract_strided_slice %6 {offsets = [11, 0], sizes = [1, 256], strides = [1, 1]} : vector<16x256xf32> to vector<1x256xf32>
    %c221_i32 = arith.constant 221 : i32
    %39 = tpu.dynamic_rotate %38 by %c221_i32 dim 1 : vector<1x256xf32>, i32 -> vector<1x256xf32>
    %40 = arith.addf %37, %39 : vector<1x256xf32>
    %41 = vector.extract_strided_slice %6 {offsets = [12, 0], sizes = [1, 256], strides = [1, 1]} : vector<16x256xf32> to vector<1x256xf32>
    %c208_i32 = arith.constant 208 : i32
    %42 = tpu.dynamic_rotate %41 by %c208_i32 dim 1 : vector<1x256xf32>, i32 -> vector<1x256xf32>
    %43 = arith.addf %40, %42 : vector<1x256xf32>
    %44 = vector.extract_strided_slice %6 {offsets = [13, 0], sizes = [1, 256], strides = [1, 1]} : vector<16x256xf32> to vector<1x256xf32>
    %c207_i32 = arith.constant 207 : i32
    %45 = tpu.dynamic_rotate %44 by %c207_i32 dim 1 : vector<1x256xf32>, i32 -> vector<1x256xf32>
    %46 = arith.addf %43, %45 : vector<1x256xf32>
    %47 = vector.extract_strided_slice %6 {offsets = [14, 0], sizes = [1, 256], strides = [1, 1]} : vector<16x256xf32> to vector<1x256xf32>
    %c206_i32 = arith.constant 206 : i32
    %48 = tpu.dynamic_rotate %47 by %c206_i32 dim 1 : vector<1x256xf32>, i32 -> vector<1x256xf32>
    %49 = arith.addf %46, %48 : vector<1x256xf32>
    %50 = vector.extract_strided_slice %6 {offsets = [15, 0], sizes = [1, 256], strides = [1, 1]} : vector<16x256xf32> to vector<1x256xf32>
    %c205_i32 = arith.constant 205 : i32
    %51 = tpu.dynamic_rotate %50 by %c205_i32 dim 1 : vector<1x256xf32>, i32 -> vector<1x256xf32>
    %52 = arith.addf %49, %51 : vector<1x256xf32>
    %53 = vector.extract_strided_slice %0 {offsets = [1, 0, 0], sizes = [1, 16, 4], strides = [1, 1, 1]} : vector<2x16x4xf32> to vector<1x16x4xf32>
    %54 = vector.shape_cast %53 : vector<1x16x4xf32> to vector<16x4xf32>
    %55 = vector.extract_strided_slice %1 {offsets = [1, 0, 0], sizes = [1, 4, 256], strides = [1, 1, 1]} : vector<2x4x256xf32> to vector<1x4x256xf32>
    %56 = vector.shape_cast %55 : vector<1x4x256xf32> to vector<4x256xf32>
    %cst_5 = arith.constant dense<0.000000e+00> : vector<16x256xf32>
    %57 = tpu.matmul %54, %56, %cst_5 {dimension_numbers = #tpu.dot_dimension_numbers<[1], [0], [0], [1], [0, 0, 1, 1], [], []>} : vector<16x4xf32>, vector<4x256xf32>, vector<16x256xf32> -> vector<16x256xf32>
    %58 = vector.extract_strided_slice %57 {offsets = [0, 0], sizes = [1, 256], strides = [1, 1]} : vector<16x256xf32> to vector<1x256xf32>
    %59 = vector.extract_strided_slice %57 {offsets = [1, 0], sizes = [1, 256], strides = [1, 1]} : vector<16x256xf32> to vector<1x256xf32>
    %c255_i32_6 = arith.constant 255 : i32
    %60 = tpu.dynamic_rotate %59 by %c255_i32_6 dim 1 : vector<1x256xf32>, i32 -> vector<1x256xf32>
    %61 = arith.addf %58, %60 : vector<1x256xf32>
    %62 = vector.extract_strided_slice %57 {offsets = [2, 0], sizes = [1, 256], strides = [1, 1]} : vector<16x256xf32> to vector<1x256xf32>
    %c254_i32_7 = arith.constant 254 : i32
    %63 = tpu.dynamic_rotate %62 by %c254_i32_7 dim 1 : vector<1x256xf32>, i32 -> vector<1x256xf32>
    %64 = arith.addf %61, %63 : vector<1x256xf32>
    %65 = vector.extract_strided_slice %57 {offsets = [3, 0], sizes = [1, 256], strides = [1, 1]} : vector<16x256xf32> to vector<1x256xf32>
    %c253_i32_8 = arith.constant 253 : i32
    %66 = tpu.dynamic_rotate %65 by %c253_i32_8 dim 1 : vector<1x256xf32>, i32 -> vector<1x256xf32>
    %67 = arith.addf %64, %66 : vector<1x256xf32>
    %68 = vector.extract_strided_slice %57 {offsets = [4, 0], sizes = [1, 256], strides = [1, 1]} : vector<16x256xf32> to vector<1x256xf32>
    %c240_i32_9 = arith.constant 240 : i32
    %69 = tpu.dynamic_rotate %68 by %c240_i32_9 dim 1 : vector<1x256xf32>, i32 -> vector<1x256xf32>
    %70 = arith.addf %67, %69 : vector<1x256xf32>
    %71 = vector.extract_strided_slice %57 {offsets = [5, 0], sizes = [1, 256], strides = [1, 1]} : vector<16x256xf32> to vector<1x256xf32>
    %c239_i32_10 = arith.constant 239 : i32
    %72 = tpu.dynamic_rotate %71 by %c239_i32_10 dim 1 : vector<1x256xf32>, i32 -> vector<1x256xf32>
    %73 = arith.addf %70, %72 : vector<1x256xf32>
    %74 = vector.extract_strided_slice %57 {offsets = [6, 0], sizes = [1, 256], strides = [1, 1]} : vector<16x256xf32> to vector<1x256xf32>
    %c238_i32_11 = arith.constant 238 : i32
    %75 = tpu.dynamic_rotate %74 by %c238_i32_11 dim 1 : vector<1x256xf32>, i32 -> vector<1x256xf32>
    %76 = arith.addf %73, %75 : vector<1x256xf32>
    %77 = vector.extract_strided_slice %57 {offsets = [7, 0], sizes = [1, 256], strides = [1, 1]} : vector<16x256xf32> to vector<1x256xf32>
    %c237_i32_12 = arith.constant 237 : i32
    %78 = tpu.dynamic_rotate %77 by %c237_i32_12 dim 1 : vector<1x256xf32>, i32 -> vector<1x256xf32>
    %79 = arith.addf %76, %78 : vector<1x256xf32>
    %80 = vector.extract_strided_slice %57 {offsets = [8, 0], sizes = [1, 256], strides = [1, 1]} : vector<16x256xf32> to vector<1x256xf32>
    %c224_i32_13 = arith.constant 224 : i32
    %81 = tpu.dynamic_rotate %80 by %c224_i32_13 dim 1 : vector<1x256xf32>, i32 -> vector<1x256xf32>
    %82 = arith.addf %79, %81 : vector<1x256xf32>
    %83 = vector.extract_strided_slice %57 {offsets = [9, 0], sizes = [1, 256], strides = [1, 1]} : vector<16x256xf32> to vector<1x256xf32>
    %c223_i32_14 = arith.constant 223 : i32
    %84 = tpu.dynamic_rotate %83 by %c223_i32_14 dim 1 : vector<1x256xf32>, i32 -> vector<1x256xf32>
    %85 = arith.addf %82, %84 : vector<1x256xf32>
    %86 = vector.extract_strided_slice %57 {offsets = [10, 0], sizes = [1, 256], strides = [1, 1]} : vector<16x256xf32> to vector<1x256xf32>
    %c222_i32_15 = arith.constant 222 : i32
    %87 = tpu.dynamic_rotate %86 by %c222_i32_15 dim 1 : vector<1x256xf32>, i32 -> vector<1x256xf32>
    %88 = arith.addf %85, %87 : vector<1x256xf32>
    %89 = vector.extract_strided_slice %57 {offsets = [11, 0], sizes = [1, 256], strides = [1, 1]} : vector<16x256xf32> to vector<1x256xf32>
    %c221_i32_16 = arith.constant 221 : i32
    %90 = tpu.dynamic_rotate %89 by %c221_i32_16 dim 1 : vector<1x256xf32>, i32 -> vector<1x256xf32>
    %91 = arith.addf %88, %90 : vector<1x256xf32>
    %92 = vector.extract_strided_slice %57 {offsets = [12, 0], sizes = [1, 256], strides = [1, 1]} : vector<16x256xf32> to vector<1x256xf32>
    %c208_i32_17 = arith.constant 208 : i32
    %93 = tpu.dynamic_rotate %92 by %c208_i32_17 dim 1 : vector<1x256xf32>, i32 -> vector<1x256xf32>
    %94 = arith.addf %91, %93 : vector<1x256xf32>
    %95 = vector.extract_strided_slice %57 {offsets = [13, 0], sizes = [1, 256], strides = [1, 1]} : vector<16x256xf32> to vector<1x256xf32>
    %c207_i32_18 = arith.constant 207 : i32
    %96 = tpu.dynamic_rotate %95 by %c207_i32_18 dim 1 : vector<1x256xf32>, i32 -> vector<1x256xf32>
    %97 = arith.addf %94, %96 : vector<1x256xf32>
    %98 = vector.extract_strided_slice %57 {offsets = [14, 0], sizes = [1, 256], strides = [1, 1]} : vector<16x256xf32> to vector<1x256xf32>
    %c206_i32_19 = arith.constant 206 : i32
    %99 = tpu.dynamic_rotate %98 by %c206_i32_19 dim 1 : vector<1x256xf32>, i32 -> vector<1x256xf32>
    %100 = arith.addf %97, %99 : vector<1x256xf32>
    %101 = vector.extract_strided_slice %57 {offsets = [15, 0], sizes = [1, 256], strides = [1, 1]} : vector<16x256xf32> to vector<1x256xf32>
    %c205_i32_20 = arith.constant 205 : i32
    %102 = tpu.dynamic_rotate %101 by %c205_i32_20 dim 1 : vector<1x256xf32>, i32 -> vector<1x256xf32>
    %103 = arith.addf %100, %102 : vector<1x256xf32>
    %104 = tpu.concatenate %52, %103 in 0 : vector<1x256xf32>, vector<1x256xf32> -> vector<2x256xf32>
    %c0_21 = arith.constant 0 : index
    %c0_22 = arith.constant 0 : index
    %105 = vector.load %arg3[%c0_21, %c0_22] : memref<2x256xf32, #tpu.memory_space<vmem>>, vector<2x256xf32>
    tpu.vector_store %arg3[%c0_21, %c0_22], %104 {strides = array<i32>} : memref<2x256xf32, #tpu.memory_space<vmem>>, vector<2x256xf32>,
    return
  }
  func.func @transform_0(%arg0: i32) -> (i32, i32, i32) {
    %c0_i32 = arith.constant 0 : i32
    %c0_i32_0 = arith.constant 0 : i32
    %c0_i32_1 = arith.constant 0 : i32
    return %arg0, %c0_i32, %c0_i32_0 : i32, i32, i32
  }
  func.func @transform_1(%arg0: i32) -> (i32, i32, i32) {
    %c0_i32 = arith.constant 0 : i32
    %c0_i32_0 = arith.constant 0 : i32
    %c0_i32_1 = arith.constant 0 : i32
    return %arg0, %c0_i32, %c0_i32_0 : i32, i32, i32
  }
  func.func @transform_2(%arg0: i32) -> (i32, i32) {
    %c0_i32 = arith.constant 0 : i32
    %c0_i32_0 = arith.constant 0 : i32
    return %arg0, %c0_i32 : i32, i32
  }
}

</mosaic_0001>

<llo_original>
// kernel: siamese_xcorr.1
$region0: #{siamese_xcorr.1}
  #allocation0 [shape = 'u32[]', space=smem, size = 0x4, offset = 0x4, fixed_abs, tag = 'smem constant byte address 0x4 - core index']
  #allocation1 [shape = 'u32[72,128]{1,0:T(1,128)}', space=vmem, size = 0x9000, scoped, tag = 'internal scratch']
  %s0 = inlined_call_operand.vmem [shape: f32[2,16,4], index: 0, kind: input, shape index: {}]
  %s1 = inlined_call_operand.vmem [shape: f32[2,4,256], index: 1, kind: input, shape index: {}]
  %s2 = inlined_call_operand.vmem [shape: f32[2,256], index: 2, kind: output, shape index: {}]
  %s3 = sld [smem:[#allocation0]]
  $region18: #{siamese_xcorr.1} parent=0
    _
  %s5 = ssub.s32 1, %s3
  %s6 = scalar_select 0, %s5, %s3
  // Predicated region
  $region2: #{siamese_xcorr.1} parent=0 // pred_check
    _
  $region3: #{siamese_xcorr.1} parent=0 // pred_check_branch
    %8 = sbr.rel (0) target = $region5
  $region4: #{siamese_xcorr.1} parent=0 // pred_region
    _
  $region5: #{siamese_xcorr.1} parent=0 // pred_fallthru
    _
  // Predicated region
  $region6: #{siamese_xcorr.1} parent=0 // pred_check
    _
  $region7: #{siamese_xcorr.1} parent=0 // pred_check_branch
    %10 = sbr.rel (0) target = $region9
  $region8: #{siamese_xcorr.1} parent=0 // pred_region
    _
  $region9: #{siamese_xcorr.1} parent=0 // pred_fallthru
    _
  %v11 = vld [vmem:[%s0] sm:$0xff]
  %v12 = vld [vmem:[%s0 + $0x8] sm:$0xff]
  %v13 = vld [vmem:[%s0 + $0x10] sm:$0xff]
  %v14 = vld [vmem:[%s0 + $0x18] sm:$0xff]
  %v15 = vld [vmem:[%s1] sm:$0xff]
  %v16 = vld [vmem:[%s1 + $0x8] sm:$0xff]
  %18 = vst [vmem:[#allocation1] ss:$2 sm:$0xff] %v15
  %v19 = vld.sshfl [vmem:[#allocation1] sm:$0xff pattern:$0x75316420]
  %v20 = vld.sshfl [vmem:[#allocation1 + $0x8] sm:$0xff pattern:$0x75316420]
  %vm21 = vcmask 31744
  %v23 = vsel %vm21, %v11, 0
  %v26 = vsel %vm21, %v12, 0
  %vm28 = vcmask 1043456
  %v29 = vsel %vm28, %v19, 0
  %v31 = vsel %vm28, %v20, 0
  %33 = vmatpush.msra.mxu0 0.0
  %34 = vmatpush.msra.mxu0 0.0
  %35 = vmatpush.msra.mxu0 0.0
  %36 = vmatpush.msra.mxu0 0.0
  %37 = vmatpush.msra.mxu0 0.0
  %38 = vmatpush.msra.mxu0 0.0
  %39 = vmatpush.msra.mxu0 0.0
  %40 = vmatpush.msra.mxu0 0.0
  %41 = vmatpush.msra.mxu0 0.0
  %42 = vmatpush.msra.mxu0 0.0
  %43 = vmatpush.msra.mxu0 0.0
  %44 = vmatpush.msra.mxu0 0.0
  %45 = vmatpush.msra.mxu0 0.0
  %46 = vmatpush.msra.mxu0 0.0
  %47 = vmatpush.msra.mxu0 0.0
  %48 = vmatpush.msra.mxu0 %v29
  %49 = vmatmul.f32.gmra.mxu0 %v23
  %v50 = vpop.f32.mrf.mxu0
  %v51 = vadd.f32 0.0, %v50
  %52 = vmatmul.f32.gmra.mxu0 %v26
  %v53 = vpop.f32.mrf.mxu0
  %v54 = vadd.f32 0.0, %v53
  %55 = vdwg.mxu0
  %56 = vmatpush.msra.mxu0 0.0
  %57 = vmatpush.msra.mxu0 0.0
  %58 = vmatpush.msra.mxu0 0.0
  %59 = vmatpush.msra.mxu0 0.0
  %60 = vmatpush.msra.mxu0 0.0
  %61 = vmatpush.msra.mxu0 0.0
  %62 = vmatpush.msra.mxu0 0.0
  %63 = vmatpush.msra.mxu0 0.0
  %64 = vmatpush.msra.mxu0 0.0
  %65 = vmatpush.msra.mxu0 0.0
  %66 = vmatpush.msra.mxu0 0.0
  %67 = vmatpush.msra.mxu0 0.0
  %68 = vmatpush.msra.mxu0 0.0
  %69 = vmatpush.msra.mxu0 0.0
  %70 = vmatpush.msra.mxu0 0.0
  %71 = vmatpush.msra.mxu0 %v31
  %72 = vmatmul.f32.gmra.mxu0 %v23
  %v73 = vpop.f32.mrf.mxu0
  %v74 = vadd.f32 0.0, %v73
  %75 = vmatmul.f32.gmra.mxu0 %v26
  %v76 = vpop.f32.mrf.mxu0
  %v77 = vadd.f32 0.0, %v76
  %78 = vdwg.mxu0
  %v81 = vrot.slane %v51, 1
  %v82 = vrot.slane %v74, 1
  %85 = vrot.lane.b32.xlu0 %v81, 127
  %v86 = vpop.permute.xlu0 %85
  %87 = vrot.lane.b32.xlu0 %v82, 127
  %v88 = vpop.permute.xlu0 %87
  %v89 = vlaneseq
  %v90 = vand.u32 %v89, 127
  %vm91 = vcmp.lt.s32.totalorder %v90, 127
  %v92 = vsel %vm91, %v86, %v88
  %v93 = vsel %vm91, %v88, %v86
  %v94 = vadd.f32 %v51, %v92
  %v95 = vadd.f32 %v74, %v93
  %v96 = vrot.slane %v51, 2
  %v97 = vrot.slane %v74, 2
  %100 = vrot.lane.b32.xlu0 %v96, 126
  %v101 = vpop.permute.xlu0 %100
  %102 = vrot.lane.b32.xlu0 %v97, 126
  %v103 = vpop.permute.xlu0 %102
  %vm104 = vcmp.lt.s32.totalorder %v90, 126
  %v105 = vsel %vm104, %v101, %v103
  %v106 = vsel %vm104, %v103, %v101
  %v107 = vadd.f32 %v94, %v105
  %v108 = vadd.f32 %v95, %v106
  %v109 = vrot.slane %v51, 3
  %v110 = vrot.slane %v74, 3
  %113 = vrot.lane.b32.xlu0 %v109, 125
  %v114 = vpop.permute.xlu0 %113
  %115 = vrot.lane.b32.xlu0 %v110, 125
  %v116 = vpop.permute.xlu0 %115
  %vm117 = vcmp.lt.s32.totalorder %v90, 125
  %v118 = vsel %vm117, %v114, %v116
  %v119 = vsel %vm117, %v116, %v114
  %v120 = vadd.f32 %v107, %v118
  %v121 = vadd.f32 %v108, %v119
  %v122 = vrot.slane %v51, 4
  %v123 = vrot.slane %v74, 4
  %126 = vrot.lane.b32.xlu0 %v122, 112
  %v127 = vpop.permute.xlu0 %126
  %128 = vrot.lane.b32.xlu0 %v123, 112
  %v129 = vpop.permute.xlu0 %128
  %vm130 = vcmp.lt.s32.totalorder %v90, 112
  %v131 = vsel %vm130, %v127, %v129
  %v132 = vsel %vm130, %v129, %v127
  %v133 = vadd.f32 %v120, %v131
  %v134 = vadd.f32 %v121, %v132
  %v135 = vrot.slane %v51, 5
  %v136 = vrot.slane %v74, 5
  %139 = vrot.lane.b32.xlu0 %v135, 111
  %v140 = vpop.permute.xlu0 %139
  %141 = vrot.lane.b32.xlu0 %v136, 111
  %v142 = vpop.permute.xlu0 %141
  %vm143 = vcmp.lt.s32.totalorder %v90, 111
  %v144 = vsel %vm143, %v140, %v142
  %v145 = vsel %vm143, %v142, %v140
  %v146 = vadd.f32 %v133, %v144
  %v147 = vadd.f32 %v134, %v145
  %v148 = vrot.slane %v51, 6
  %v149 = vrot.slane %v74, 6
  %152 = vrot.lane.b32.xlu0 %v148, 110
  %v153 = vpop.permute.xlu0 %152
  %154 = vrot.lane.b32.xlu0 %v149, 110
  %v155 = vpop.permute.xlu0 %154
  %vm156 = vcmp.lt.s32.totalorder %v90, 110
  %v157 = vsel %vm156, %v153, %v155
  %v158 = vsel %vm156, %v155, %v153
  %v159 = vadd.f32 %v146, %v157
  %v160 = vadd.f32 %v147, %v158
  %v161 = vrot.slane %v51, 7
  %v162 = vrot.slane %v74, 7
  %165 = vrot.lane.b32.xlu0 %v161, 109
  %v166 = vpop.permute.xlu0 %165
  %167 = vrot.lane.b32.xlu0 %v162, 109
  %v168 = vpop.permute.xlu0 %167
  %vm169 = vcmp.lt.s32.totalorder %v90, 109
  %v170 = vsel %vm169, %v166, %v168
  %v171 = vsel %vm169, %v168, %v166
  %v172 = vadd.f32 %v159, %v170
  %v173 = vadd.f32 %v160, %v171
  %174 = vrot.lane.b32.xlu0 %v54, 96
  %v175 = vpop.permute.xlu0 %174
  %176 = vrot.lane.b32.xlu0 %v77, 96
  %v177 = vpop.permute.xlu0 %176
  %vm178 = vcmp.lt.s32.totalorder %v90, 96
  %v179 = vsel %vm178, %v175, %v177
  %v180 = vsel %vm178, %v177, %v175
  %v181 = vadd.f32 %v172, %v179
  %v182 = vadd.f32 %v173, %v180
  %v185 = vrot.slane %v54, 1
  %v186 = vrot.slane %v77, 1
  %189 = vrot.lane.b32.xlu0 %v185, 95
  %v190 = vpop.permute.xlu0 %189
  %191 = vrot.lane.b32.xlu0 %v186, 95
  %v192 = vpop.permute.xlu0 %191
  %vm193 = vcmp.lt.s32.totalorder %v90, 95
  %v194 = vsel %vm193, %v190, %v192
  %v195 = vsel %vm193, %v192, %v190
  %v196 = vadd.f32 %v181, %v194
  %v197 = vadd.f32 %v182, %v195
  %v198 = vrot.slane %v54, 2
  %v199 = vrot.slane %v77, 2
  %202 = vrot.lane.b32.xlu0 %v198, 94
  %v203 = vpop.permute.xlu0 %202
  %204 = vrot.lane.b32.xlu0 %v199, 94
  %v205 = vpop.permute.xlu0 %204
  %vm206 = vcmp.lt.s32.totalorder %v90, 94
  %v207 = vsel %vm206, %v203, %v205
  %v208 = vsel %vm206, %v205, %v203
  %v209 = vadd.f32 %v196, %v207
  %v210 = vadd.f32 %v197, %v208
  %v211 = vrot.slane %v54, 3
  %v212 = vrot.slane %v77, 3
  %215 = vrot.lane.b32.xlu0 %v211, 93
  %v216 = vpop.permute.xlu0 %215
  %217 = vrot.lane.b32.xlu0 %v212, 93
  %v218 = vpop.permute.xlu0 %217
  %vm219 = vcmp.lt.s32.totalorder %v90, 93
  %v220 = vsel %vm219, %v216, %v218
  %v221 = vsel %vm219, %v218, %v216
  %v222 = vadd.f32 %v209, %v220
  %v223 = vadd.f32 %v210, %v221
  %v224 = vrot.slane %v54, 4
  %v225 = vrot.slane %v77, 4
  %228 = vrot.lane.b32.xlu0 %v224, 80
  %v229 = vpop.permute.xlu0 %228
  %230 = vrot.lane.b32.xlu0 %v225, 80
  %v231 = vpop.permute.xlu0 %230
  %vm232 = vcmp.lt.s32.totalorder %v90, 80
  %v233 = vsel %vm232, %v229, %v231
  %v234 = vsel %vm232, %v231, %v229
  %v235 = vadd.f32 %v222, %v233
  %v236 = vadd.f32 %v223, %v234
  %v237 = vrot.slane %v54, 5
  %v238 = vrot.slane %v77, 5
  %241 = vrot.lane.b32.xlu0 %v237, 79
  %v242 = vpop.permute.xlu0 %241
  %243 = vrot.lane.b32.xlu0 %v238, 79
  %v244 = vpop.permute.xlu0 %243
  %vm245 = vcmp.lt.s32.totalorder %v90, 79
  %v246 = vsel %vm245, %v242, %v244
  %v247 = vsel %vm245, %v244, %v242
  %v248 = vadd.f32 %v235, %v246
  %v249 = vadd.f32 %v236, %v247
  %v250 = vrot.slane %v54, 6
  %v251 = vrot.slane %v77, 6
  %254 = vrot.lane.b32.xlu0 %v250, 78
  %v255 = vpop.permute.xlu0 %254
  %256 = vrot.lane.b32.xlu0 %v251, 78
  %v257 = vpop.permute.xlu0 %256
  %vm258 = vcmp.lt.s32.totalorder %v90, 78
  %v259 = vsel %vm258, %v255, %v257
  %v260 = vsel %vm258, %v257, %v255
  %v261 = vadd.f32 %v248, %v259
  %v262 = vadd.f32 %v249, %v260
  %v263 = vrot.slane %v54, 7
  %v264 = vrot.slane %v77, 7
  %267 = vrot.lane.b32.xlu0 %v263, 77
  %v268 = vpop.permute.xlu0 %267
  %269 = vrot.lane.b32.xlu0 %v264, 77
  %v270 = vpop.permute.xlu0 %269
  %vm271 = vcmp.lt.s32.totalorder %v90, 77
  %v272 = vsel %vm271, %v268, %v270
  %v273 = vsel %vm271, %v270, %v268
  %v274 = vadd.f32 %v261, %v272
  %v275 = vadd.f32 %v262, %v273
  %277 = vst [vmem:[#allocation1] ss:$2 sm:$0xff] %v16
  %v278 = vld.sshfl [vmem:[#allocation1] sm:$0xff pattern:$0x75316420]
  %v279 = vld.sshfl [vmem:[#allocation1 + $0x8] sm:$0xff pattern:$0x75316420]
  %v281 = vsel %vm21, %v13, 0
  %v284 = vsel %vm21, %v14, 0
  %v286 = vsel %vm28, %v278, 0
  %v288 = vsel %vm28, %v279, 0
  %290 = vmatpush.msra.mxu0 0.0
  %291 = vmatpush.msra.mxu0 0.0
  %292 = vmatpush.msra.mxu0 0.0
  %293 = vmatpush.msra.mxu0 0.0
  %294 = vmatpush.msra.mxu0 0.0
  %295 = vmatpush.msra.mxu0 0.0
  %296 = vmatpush.msra.mxu0 0.0
  %297 = vmatpush.msra.mxu0 0.0
  %298 = vmatpush.msra.mxu0 0.0
  %299 = vmatpush.msra.mxu0 0.0
  %300 = vmatpush.msra.mxu0 0.0
  %301 = vmatpush.msra.mxu0 0.0
  %302 = vmatpush.msra.mxu0 0.0
  %303 = vmatpush.msra.mxu0 0.0
  %304 = vmatpush.msra.mxu0 0.0
  %305 = vmatpush.msra.mxu0 %v286
  %306 = vmatmul.f32.gmra.mxu0 %v281
  %v307 = vpop.f32.mrf.mxu0
  %v308 = vadd.f32 0.0, %v307
  %309 = vmatmul.f32.gmra.mxu0 %v284
  %v310 = vpop.f32.mrf.mxu0
  %v311 = vadd.f32 0.0, %v310
  %312 = vdwg.mxu0
  %313 = vmatpush.msra.mxu0 0.0
  %314 = vmatpush.msra.mxu0 0.0
  %315 = vmatpush.msra.mxu0 0.0
  %316 = vmatpush.msra.mxu0 0.0
  %317 = vmatpush.msra.mxu0 0.0
  %318 = vmatpush.msra.mxu0 0.0
  %319 = vmatpush.msra.mxu0 0.0
  %320 = vmatpush.msra.mxu0 0.0
  %321 = vmatpush.msra.mxu0 0.0
  %322 = vmatpush.msra.mxu0 0.0
  %323 = vmatpush.msra.mxu0 0.0
  %324 = vmatpush.msra.mxu0 0.0
  %325 = vmatpush.msra.mxu0 0.0
  %326 = vmatpush.msra.mxu0 0.0
  %327 = vmatpush.msra.mxu0 0.0
  %328 = vmatpush.msra.mxu0 %v288
  %329 = vmatmul.f32.gmra.mxu0 %v281
  %v330 = vpop.f32.mrf.mxu0
  %v331 = vadd.f32 0.0, %v330
  %332 = vmatmul.f32.gmra.mxu0 %v284
  %v333 = vpop.f32.mrf.mxu0
  %v334 = vadd.f32 0.0, %v333
  %335 = vdwg.mxu0
  %v338 = vrot.slane %v308, 1
  %v339 = vrot.slane %v331, 1
  %342 = vrot.lane.b32.xlu0 %v338, 127
  %v343 = vpop.permute.xlu0 %342
  %344 = vrot.lane.b32.xlu0 %v339, 127
  %v345 = vpop.permute.xlu0 %344
  %v346 = vsel %vm91, %v343, %v345
  %v347 = vsel %vm91, %v345, %v343
  %v348 = vadd.f32 %v308, %v346
  %v349 = vadd.f32 %v331, %v347
  %v350 = vrot.slane %v308, 2
  %v351 = vrot.slane %v331, 2
  %354 = vrot.lane.b32.xlu0 %v350, 126
  %v355 = vpop.permute.xlu0 %354
  %356 = vrot.lane.b32.xlu0 %v351, 126
  %v357 = vpop.permute.xlu0 %356
  %v358 = vsel %vm104, %v355, %v357
  %v359 = vsel %vm104, %v357, %v355
  %v360 = vadd.f32 %v348, %v358
  %v361 = vadd.f32 %v349, %v359
  %v362 = vrot.slane %v308, 3
  %v363 = vrot.slane %v331, 3
  %366 = vrot.lane.b32.xlu0 %v362, 125
  %v367 = vpop.permute.xlu0 %366
  %368 = vrot.lane.b32.xlu0 %v363, 125
  %v369 = vpop.permute.xlu0 %368
  %v370 = vsel %vm117, %v367, %v369
  %v371 = vsel %vm117, %v369, %v367
  %v372 = vadd.f32 %v360, %v370
  %v373 = vadd.f32 %v361, %v371
  %v374 = vrot.slane %v308, 4
  %v375 = vrot.slane %v331, 4
  %378 = vrot.lane.b32.xlu0 %v374, 112
  %v379 = vpop.permute.xlu0 %378
  %380 = vrot.lane.b32.xlu0 %v375, 112
  %v381 = vpop.permute.xlu0 %380
  %v382 = vsel %vm130, %v379, %v381
  %v383 = vsel %vm130, %v381, %v379
  %v384 = vadd.f32 %v372, %v382
  %v385 = vadd.f32 %v373, %v383
  %v386 = vrot.slane %v308, 5
  %v387 = vrot.slane %v331, 5
  %390 = vrot.lane.b32.xlu0 %v386, 111
  %v391 = vpop.permute.xlu0 %390
  %392 = vrot.lane.b32.xlu0 %v387, 111
  %v393 = vpop.permute.xlu0 %392
  %v394 = vsel %vm143, %v391, %v393
  %v395 = vsel %vm143, %v393, %v391
  %v396 = vadd.f32 %v384, %v394
  %v397 = vadd.f32 %v385, %v395
  %v398 = vrot.slane %v308, 6
  %v399 = vrot.slane %v331, 6
  %402 = vrot.lane.b32.xlu0 %v398, 110
  %v403 = vpop.permute.xlu0 %402
  %404 = vrot.lane.b32.xlu0 %v399, 110
  %v405 = vpop.permute.xlu0 %404
  %v406 = vsel %vm156, %v403, %v405
  %v407 = vsel %vm156, %v405, %v403
  %v408 = vadd.f32 %v396, %v406
  %v409 = vadd.f32 %v397, %v407
  %v410 = vrot.slane %v308, 7
  %v411 = vrot.slane %v331, 7
  %414 = vrot.lane.b32.xlu0 %v410, 109
  %v415 = vpop.permute.xlu0 %414
  %416 = vrot.lane.b32.xlu0 %v411, 109
  %v417 = vpop.permute.xlu0 %416
  %v418 = vsel %vm169, %v415, %v417
  %v419 = vsel %vm169, %v417, %v415
  %v420 = vadd.f32 %v408, %v418
  %v421 = vadd.f32 %v409, %v419
  %422 = vrot.lane.b32.xlu0 %v311, 96
  %v423 = vpop.permute.xlu0 %422
  %424 = vrot.lane.b32.xlu0 %v334, 96
  %v425 = vpop.permute.xlu0 %424
  %v426 = vsel %vm178, %v423, %v425
  %v427 = vsel %vm178, %v425, %v423
  %v428 = vadd.f32 %v420, %v426
  %v429 = vadd.f32 %v421, %v427
  %v432 = vrot.slane %v311, 1
  %v433 = vrot.slane %v334, 1
  %436 = vrot.lane.b32.xlu0 %v432, 95
  %v437 = vpop.permute.xlu0 %436
  %438 = vrot.lane.b32.xlu0 %v433, 95
  %v439 = vpop.permute.xlu0 %438
  %v440 = vsel %vm193, %v437, %v439
  %v441 = vsel %vm193, %v439, %v437
  %v442 = vadd.f32 %v428, %v440
  %v443 = vadd.f32 %v429, %v441
  %v444 = vrot.slane %v311, 2
  %v445 = vrot.slane %v334, 2
  %448 = vrot.lane.b32.xlu0 %v444, 94
  %v449 = vpop.permute.xlu0 %448
  %450 = vrot.lane.b32.xlu0 %v445, 94
  %v451 = vpop.permute.xlu0 %450
  %v452 = vsel %vm206, %v449, %v451
  %v453 = vsel %vm206, %v451, %v449
  %v454 = vadd.f32 %v442, %v452
  %v455 = vadd.f32 %v443, %v453
  %v456 = vrot.slane %v311, 3
  %v457 = vrot.slane %v334, 3
  %460 = vrot.lane.b32.xlu0 %v456, 93
  %v461 = vpop.permute.xlu0 %460
  %462 = vrot.lane.b32.xlu0 %v457, 93
  %v463 = vpop.permute.xlu0 %462
  %v464 = vsel %vm219, %v461, %v463
  %v465 = vsel %vm219, %v463, %v461
  %v466 = vadd.f32 %v454, %v464
  %v467 = vadd.f32 %v455, %v465
  %v468 = vrot.slane %v311, 4
  %v469 = vrot.slane %v334, 4
  %472 = vrot.lane.b32.xlu0 %v468, 80
  %v473 = vpop.permute.xlu0 %472
  %474 = vrot.lane.b32.xlu0 %v469, 80
  %v475 = vpop.permute.xlu0 %474
  %v476 = vsel %vm232, %v473, %v475
  %v477 = vsel %vm232, %v475, %v473
  %v478 = vadd.f32 %v466, %v476
  %v479 = vadd.f32 %v467, %v477
  %v480 = vrot.slane %v311, 5
  %v481 = vrot.slane %v334, 5
  %484 = vrot.lane.b32.xlu0 %v480, 79
  %v485 = vpop.permute.xlu0 %484
  %486 = vrot.lane.b32.xlu0 %v481, 79
  %v487 = vpop.permute.xlu0 %486
  %v488 = vsel %vm245, %v485, %v487
  %v489 = vsel %vm245, %v487, %v485
  %v490 = vadd.f32 %v478, %v488
  %v491 = vadd.f32 %v479, %v489
  %v492 = vrot.slane %v311, 6
  %v493 = vrot.slane %v334, 6
  %496 = vrot.lane.b32.xlu0 %v492, 78
  %v497 = vpop.permute.xlu0 %496
  %498 = vrot.lane.b32.xlu0 %v493, 78
  %v499 = vpop.permute.xlu0 %498
  %v500 = vsel %vm258, %v497, %v499
  %v501 = vsel %vm258, %v499, %v497
  %v502 = vadd.f32 %v490, %v500
  %v503 = vadd.f32 %v491, %v501
  %v504 = vrot.slane %v311, 7
  %v505 = vrot.slane %v334, 7
  %508 = vrot.lane.b32.xlu0 %v504, 77
  %v509 = vpop.permute.xlu0 %508
  %510 = vrot.lane.b32.xlu0 %v505, 77
  %v511 = vpop.permute.xlu0 %510
  %v512 = vsel %vm271, %v509, %v511
  %v513 = vsel %vm271, %v511, %v509
  %v514 = vadd.f32 %v502, %v512
  %v515 = vadd.f32 %v503, %v513
  %v518 = vrot.slane %v514, 7
  %v519 = vrot.slane %v515, 7
  %vm522 = vcmask 1040384
  %v523 = vsel %vm522, %v274, %v518
  %v524 = vsel %vm522, %v275, %v519
  %v527 = vrot.slane %v524, 6
  %vm528 = vcmask 1041408
  %v529 = vsel %vm528, %v523, %v527
  %531 = vst [vmem:[%s2] sm:$0xf] %v529
  // Predicated region
  $region10: #{siamese_xcorr.1} parent=0 // pred_check
    _
  $region11: #{siamese_xcorr.1} parent=0 // pred_check_branch
    %533 = sbr.rel (0) target = $region13
  $region12: #{siamese_xcorr.1} parent=0 // pred_region
    _
  $region13: #{siamese_xcorr.1} parent=0 // pred_fallthru
    _
  // Predicated region
  $region14: #{siamese_xcorr.1} parent=0 // pred_check
    _
  $region15: #{siamese_xcorr.1} parent=0 // pred_check_branch
    %535 = sbr.rel (0) target = $region17
  $region16: #{siamese_xcorr.1} parent=0 // pred_region
    _
  $region17: #{siamese_xcorr.1} parent=0 // pred_fallthru
    _

</llo_original>
